<compile_context>
chip_gen: v7x
topology: tpu7x:2x2x1
jax: 0.10.0
libtpu: 0.0.40
codegen_flags: <defaults>
</compile_context>

<pallas_src>
import functools

import jax
import jax.numpy as jnp
from jax import lax
from jax.experimental import pallas as pl
from jax.experimental.pallas import tpu as pltpu


# 3x3 tap enumeration: t = (dy+1)*3 + (dx+1); weight columns follow this order.
TAPS = tuple((dy, dx) for dy in (-1, 0, 1) for dx in (-1, 0, 1))


# ---------------------------------------------------------------------------
# Fused kernel: conv1 -> BN -> ReLU -> conv2 -> BN -> ReLU -> convT(2,2) matmul
# Activations live as (C, H*W) with H*W on the lane axis (lane-dense).
# ---------------------------------------------------------------------------
def _fused_kernel(x_ref, mask_ref, w1_ref, s1_ref, t1_ref, w2_ref, s2_ref,
                  t2_ref, wup_ref, bup_ref, o_ref, *, H, W):
    HW = H * W

    def im2col(a):
        # a: (C, H*W) -> (9*C, H*W); rows ordered tap-major, channel-minor.
        pieces = []
        for t, (dy, dx) in enumerate(TAPS):
            off = dy * W + dx
            if off == 0:
                shifted = a
            else:
                # np.roll semantics: out[p] = a[(p + off) mod HW]; wrapped /
                # out-of-image positions are zeroed by the boundary mask below.
                shifted = pltpu.roll(a, (-off) % HW, axis=1)
            if (dy, dx) != (0, 0):
                shifted = shifted * mask_ref[t:t + 1, :]   # pad=1 halo -> 0
            pieces.append(shifted)
        return jnp.concatenate(pieces, axis=0)             # (9*C, H*W)

    x = x_ref[0]                                           # (Cin, H*W)

    h1 = jnp.dot(w1_ref[...], im2col(x), preferred_element_type=jnp.float32)
    h1 = jnp.maximum(h1 * s1_ref[...] + t1_ref[...], 0.0)  # folded BN + ReLU

    h2 = jnp.dot(w2_ref[...], im2col(h1), preferred_element_type=jnp.float32)
    h2 = jnp.maximum(h2 * s2_ref[...] + t2_ref[...], 0.0)

    # ConvTranspose2d(k=2, s=2): row (di*2+dj)*Cmid + co scatters to pixel
    # (2h+di, 2w+dj); the pixel shuffle itself happens in the (tiny) wrapper.
    y4 = jnp.dot(wup_ref[...], h2, preferred_element_type=jnp.float32)
    o_ref[0] = y4 + bup_ref[...]                           # (4*Cmid, H*W)


def _tap_masks(H, W):
    # 0/1 validity mask per 3x3 tap for the pad=1 halo: (9, H*W) f32.
    hh = jnp.arange(H).reshape(H, 1)
    ww = jnp.arange(W).reshape(1, W)
    masks = []
    for dy, dx in TAPS:
        valid = ((hh + dy >= 0) & (hh + dy < H) &
                 (ww + dx >= 0) & (ww + dx < W))
        masks.append(valid.reshape(H * W))
    return jnp.stack(masks, axis=0).astype(jnp.float32)


def fused_expanding_block(x_nchw, p):
    N, Cin, H, W = x_nchw.shape
    HW = H * W
    Cout = p["w1_mat"].shape[0]
    C4 = p["wup_mat"].shape[0]                             # 4 * Cmid
    masks = _tap_masks(H, W)
    kernel = functools.partial(_fused_kernel, H=H, W=W)

    return pl.pallas_call(
        kernel,
        out_shape=jax.ShapeDtypeStruct((N, C4, HW), jnp.float32),
        grid_spec=pltpu.PrefetchScalarGridSpec(
            num_scalar_prefetch=0,
            grid=(N,),
            in_specs=[
                pl.BlockSpec((1, Cin, HW), lambda n: (n, 0, 0)),
                # constant-index blocks below stay VMEM-resident across steps
                pl.BlockSpec((9, HW), lambda n: (0, 0)),
                pl.BlockSpec((Cout, 9 * Cin), lambda n: (0, 0)),
                pl.BlockSpec((Cout, 1), lambda n: (0, 0)),
                pl.BlockSpec((Cout, 1), lambda n: (0, 0)),
                pl.BlockSpec((Cout, 9 * Cout), lambda n: (0, 0)),
                pl.BlockSpec((Cout, 1), lambda n: (0, 0)),
                pl.BlockSpec((Cout, 1), lambda n: (0, 0)),
                pl.BlockSpec((C4, Cout), lambda n: (0, 0)),
                pl.BlockSpec((C4, 1), lambda n: (0, 0)),
            ],
            out_specs=pl.BlockSpec((1, C4, HW), lambda n: (n, 0, 0)),
        ),
        compiler_params=pltpu.CompilerParams(
            dimension_semantics=("parallel",)),
    )(x_nchw.reshape(N, Cin, HW),        # free contiguous reshape of NCHW
      masks, p["w1_mat"], p["scale1"], p["shift1"],
      p["w2_mat"], p["scale2"], p["shift2"], p["wup_mat"], p["bup_col"])


# ---------------------------------------------------------------------------
# ExpandingBlock forward (NCHW in / NCHW out, like PyTorch)
# ---------------------------------------------------------------------------
def expanding_block_forward(x_nchw, skip_nchw, p):
    N, _, H, W = x_nchw.shape
    Cmid = p["wup_mat"].shape[0] // 4
    y4 = fused_expanding_block(x_nchw, p)                  # (N, 4*Cmid, H*W)
    # 2x2 pixel shuffle of the transposed conv (rows ordered (di, dj, co)).
    up = y4.reshape(N, 2, 2, Cmid, H, W)
    up = jnp.transpose(up, (0, 3, 4, 1, 5, 2))             # (N, Cmid, H, 2, W, 2)
    up = up.reshape(N, Cmid, 2 * H, 2 * W)
    return jnp.concatenate([up, skip_nchw], axis=1)        # channel concat, NCHW


# ---------------------------------------------------------------------------
# Parameters: raw PyTorch-layout tensors + folding for the kernel path.
# ---------------------------------------------------------------------------
def make_params(key, cin, cout):
    cmid = cout // 2
    ks = jax.random.split(key, 14)
    return dict(
        w1=0.1 * jax.random.normal(ks[0], (cout, cin, 3, 3), jnp.float32),
        b1=0.1 * jax.random.normal(ks[1], (cout,), jnp.float32),
        g1=1.0 + 0.1 * jax.random.normal(ks[2], (cout,), jnp.float32),
        be1=0.1 * jax.random.normal(ks[3], (cout,), jnp.float32),
        m1=0.1 * jax.random.normal(ks[4], (cout,), jnp.float32),
        v1=0.5 + jnp.abs(jax.random.normal(ks[5], (cout,), jnp.float32)),
        w2=0.1 * jax.random.normal(ks[6], (cout, cout, 3, 3), jnp.float32),
        b2=0.1 * jax.random.normal(ks[7], (cout,), jnp.float32),
        g2=1.0 + 0.1 * jax.random.normal(ks[8], (cout,), jnp.float32),
        be2=0.1 * jax.random.normal(ks[9], (cout,), jnp.float32),
        m2=0.1 * jax.random.normal(ks[10], (cout,), jnp.float32),
        v2=0.5 + jnp.abs(jax.random.normal(ks[11], (cout,), jnp.float32)),
        w_up=0.1 * jax.random.normal(ks[12], (cout, cmid, 2, 2), jnp.float32),
        b_up=0.1 * jax.random.normal(ks[13], (cmid,), jnp.float32),
    )


def fold_params(raw, eps=1e-5):
    cout, cin = raw["w1"].shape[:2]
    cmid = raw["w_up"].shape[1]

    def fold(b, g, be, m, v):
        s = g / jnp.sqrt(v + eps)
        return s.reshape(-1, 1), (be + s * (b - m)).reshape(-1, 1)

    scale1, shift1 = fold(raw["b1"], raw["g1"], raw["be1"], raw["m1"], raw["v1"])
    scale2, shift2 = fold(raw["b2"], raw["g2"], raw["be2"], raw["m2"], raw["v2"])
    # Conv2d (Cout, Cin, 3, 3) -> (Cout, 9*Cin); columns ordered (ky, kx, ci)
    # to match the kernel's tap enumeration (dy, dx) = (ky-1, kx-1).
    w1_mat = jnp.transpose(raw["w1"], (0, 2, 3, 1)).reshape(cout, 9 * cin)
    w2_mat = jnp.transpose(raw["w2"], (0, 2, 3, 1)).reshape(cout, 9 * cout)
    # ConvTranspose2d (Cin=cout, Cmid, 2, 2) -> (4*Cmid, cout), rows (di, dj, co).
    wup_mat = jnp.transpose(raw["w_up"], (2, 3, 1, 0)).reshape(4 * cmid, cout)
    bup_col = jnp.tile(raw["b_up"], 4).reshape(4 * cmid, 1)
    return dict(w1_mat=w1_mat, scale1=scale1, shift1=shift1,
                w2_mat=w2_mat, scale2=scale2, shift2=shift2,
                wup_mat=wup_mat, bup_col=bup_col)


# ---------------------------------------------------------------------------
# Independent pure-JAX reference (raw weights, un-folded BN, lax conv,
# ConvTranspose straight from its definition).
# ---------------------------------------------------------------------------
def reference_forward(x, skip, raw, eps=1e-5):
    def bcast(v):
        return v.reshape(1, -1, 1, 1)

    dn = ("NCHW", "OIHW", "NCHW")
    h = lax.conv_general_dilated(x, raw["w1"], (1, 1), "SAME",
                                 dimension_numbers=dn) + bcast(raw["b1"])
    h = (h - bcast(raw["m1"])) / jnp.sqrt(bcast(raw["v1"]) + eps)
    h = jnp.maximum(h * bcast(raw["g1"]) + bcast(raw["be1"]), 0.0)
    h = lax.conv_general_dilated(h, raw["w2"], (1, 1), "SAME",
                                 dimension_numbers=dn) + bcast(raw["b2"])
    h = (h - bcast(raw["m2"])) / jnp.sqrt(bcast(raw["v2"]) + eps)
    h = jnp.maximum(h * bcast(raw["g2"]) + bcast(raw["be2"]), 0.0)
    # ConvTranspose2d(k=2, s=2): out[n,o,2h+i,2w+j] = b[o] + sum_c h[n,c,h,w]*W[c,o,i,j]
    n, _, H, W = h.shape
    cmid = raw["w_up"].shape[1]
    t = jnp.einsum("nchw,coij->nohiwj", h, raw["w_up"])
    up = t.reshape(n, cmid, 2 * H, 2 * W) + bcast(raw["b_up"])
    return jnp.concatenate([up, skip], axis=1)


if __name__ == "__main__":
    # ExpandingBlock(in_channels=8, out_channels=8): upsample emits 4 channels,
    # skip supplies 4 channels at 2x spatial resolution.
    N, CIN, COUT, H, W = 2, 8, 8, 16, 16
    key = jax.random.PRNGKey(0)
    kx, kskip, kp = jax.random.split(key, 3)

    x = jax.random.normal(kx, (N, CIN, H, W), jnp.float32)               # NCHW
    skip = jax.random.normal(kskip, (N, COUT // 2, 2 * H, 2 * W), jnp.float32)
    raw = make_params(kp, CIN, COUT)
    params = fold_params(raw)

    out = jax.block_until_ready(expanding_block_forward(x, skip, params))
    ref = jax.block_until_ready(reference_forward(x, skip, raw))

    assert out.shape == (N, COUT, 2 * H, 2 * W), out.shape
    err = float(jnp.max(jnp.abs(out - ref)))
    assert err < 1e-3, err
    print("KERNEL_OK")
</pallas_src>

<mosaic_0001>
module attributes {stable_mosaic.version = 11 : i64} {
  func.func @_fused_kernel(%arg0: i32, %arg1: memref<1x8x256xf32, #tpu.memory_space<vmem>>, %arg2: memref<9x256xf32, #tpu.memory_space<vmem>>, %arg3: memref<8x72xf32, #tpu.memory_space<vmem>>, %arg4: memref<8x1xf32, #tpu.memory_space<vmem>>, %arg5: memref<8x1xf32, #tpu.memory_space<vmem>>, %arg6: memref<8x72xf32, #tpu.memory_space<vmem>>, %arg7: memref<8x1xf32, #tpu.memory_space<vmem>>, %arg8: memref<8x1xf32, #tpu.memory_space<vmem>>, %arg9: memref<16x8xf32, #tpu.memory_space<vmem>>, %arg10: memref<16x1xf32, #tpu.memory_space<vmem>>, %arg11: memref<1x16x256xf32, #tpu.memory_space<vmem>>) attributes {dimension_semantics = [#tpu.dimension_semantics<parallel>], iteration_bounds = array<i64: 2>, scalar_prefetch = 0 : i64, scratch_operands = 0 : i64, tpu.core_type = #tpu.core_type<tc>, window_params = [{transform_indices = @transform_0, window_bounds = array<i64: 1, 8, 256>}, {pipeline_mode = #tpu.pipeline_mode<synchronous>, transform_indices = @transform_1, window_bounds = array<i64: 9, 256>}, {pipeline_mode = #tpu.pipeline_mode<synchronous>, transform_indices = @transform_2, window_bounds = array<i64: 8, 72>}, {pipeline_mode = #tpu.pipeline_mode<synchronous>, transform_indices = @transform_3, window_bounds = array<i64: 8, 1>}, {pipeline_mode = #tpu.pipeline_mode<synchronous>, transform_indices = @transform_4, window_bounds = array<i64: 8, 1>}, {pipeline_mode = #tpu.pipeline_mode<synchronous>, transform_indices = @transform_5, window_bounds = array<i64: 8, 72>}, {pipeline_mode = #tpu.pipeline_mode<synchronous>, transform_indices = @transform_6, window_bounds = array<i64: 8, 1>}, {pipeline_mode = #tpu.pipeline_mode<synchronous>, transform_indices = @transform_7, window_bounds = array<i64: 8, 1>}, {pipeline_mode = #tpu.pipeline_mode<synchronous>, transform_indices = @transform_8, window_bounds = array<i64: 16, 8>}, {pipeline_mode = #tpu.pipeline_mode<synchronous>, transform_indices = @transform_9, window_bounds = array<i64: 16, 1>}, {transform_indices = @transform_10, window_bounds = array<i64: 1, 16, 256>}]} {
    %c0 = arith.constant 0 : index
    %c0_0 = arith.constant 0 : index
    %c0_1 = arith.constant 0 : index
    %0 = vector.load %arg1[%c0, %c0_0, %c0_1] : memref<1x8x256xf32, #tpu.memory_space<vmem>>, vector<1x8x256xf32>
    %1 = vector.shape_cast %0 : vector<1x8x256xf32> to vector<8x256xf32>
    %c0_2 = arith.constant 0 : index
    %c0_3 = arith.constant 0 : index
    %2 = vector.load %arg3[%c0_2, %c0_3] : memref<8x72xf32, #tpu.memory_space<vmem>>, vector<8x72xf32>
    %c17_i32 = arith.constant 17 : i32
    %3 = tpu.dynamic_rotate %1 by %c17_i32 dim 1 : vector<8x256xf32>, i32 -> vector<8x256xf32>
    %c0_4 = arith.constant 0 : index
    %c0_5 = arith.constant 0 : index
    %4 = vector.load %arg2[%c0_4, %c0_5] : memref<9x256xf32, #tpu.memory_space<vmem>>, vector<1x256xf32>
    %5 = vector.broadcast %4 : vector<1x256xf32> to vector<8x256xf32>
    %6 = arith.mulf %3, %5 : vector<8x256xf32>
    %c16_i32 = arith.constant 16 : i32
    %7 = tpu.dynamic_rotate %1 by %c16_i32 dim 1 : vector<8x256xf32>, i32 -> vector<8x256xf32>
    %c1 = arith.constant 1 : index
    %c0_6 = arith.constant 0 : index
    %8 = vector.load %arg2[%c1, %c0_6] : memref<9x256xf32, #tpu.memory_space<vmem>>, vector<1x256xf32>
    %9 = vector.broadcast %8 : vector<1x256xf32> to vector<8x256xf32>
    %10 = arith.mulf %7, %9 : vector<8x256xf32>
    %c15_i32 = arith.constant 15 : i32
    %11 = tpu.dynamic_rotate %1 by %c15_i32 dim 1 : vector<8x256xf32>, i32 -> vector<8x256xf32>
    %c2 = arith.constant 2 : index
    %c0_7 = arith.constant 0 : index
    %12 = vector.load %arg2[%c2, %c0_7] : memref<9x256xf32, #tpu.memory_space<vmem>>, vector<1x256xf32>
    %13 = vector.broadcast %12 : vector<1x256xf32> to vector<8x256xf32>
    %14 = arith.mulf %11, %13 : vector<8x256xf32>
    %c1_i32 = arith.constant 1 : i32
    %15 = tpu.dynamic_rotate %1 by %c1_i32 dim 1 : vector<8x256xf32>, i32 -> vector<8x256xf32>
    %c3 = arith.constant 3 : index
    %c0_8 = arith.constant 0 : index
    %16 = vector.load %arg2[%c3, %c0_8] : memref<9x256xf32, #tpu.memory_space<vmem>>, vector<1x256xf32>
    %17 = vector.broadcast %16 : vector<1x256xf32> to vector<8x256xf32>
    %18 = arith.mulf %15, %17 : vector<8x256xf32>
    %c255_i32 = arith.constant 255 : i32
    %19 = tpu.dynamic_rotate %1 by %c255_i32 dim 1 : vector<8x256xf32>, i32 -> vector<8x256xf32>
    %c5 = arith.constant 5 : index
    %c0_9 = arith.constant 0 : index
    %20 = vector.load %arg2[%c5, %c0_9] : memref<9x256xf32, #tpu.memory_space<vmem>>, vector<1x256xf32>
    %21 = vector.broadcast %20 : vector<1x256xf32> to vector<8x256xf32>
    %22 = arith.mulf %19, %21 : vector<8x256xf32>
    %c241_i32 = arith.constant 241 : i32
    %23 = tpu.dynamic_rotate %1 by %c241_i32 dim 1 : vector<8x256xf32>, i32 -> vector<8x256xf32>
    %c6 = arith.constant 6 : index
    %c0_10 = arith.constant 0 : index
    %24 = vector.load %arg2[%c6, %c0_10] : memref<9x256xf32, #tpu.memory_space<vmem>>, vector<1x256xf32>
    %25 = vector.broadcast %24 : vector<1x256xf32> to vector<8x256xf32>
    %26 = arith.mulf %23, %25 : vector<8x256xf32>
    %c240_i32 = arith.constant 240 : i32
    %27 = tpu.dynamic_rotate %1 by %c240_i32 dim 1 : vector<8x256xf32>, i32 -> vector<8x256xf32>
    %c7 = arith.constant 7 : index
    %c0_11 = arith.constant 0 : index
    %28 = vector.load %arg2[%c7, %c0_11] : memref<9x256xf32, #tpu.memory_space<vmem>>, vector<1x256xf32>
    %29 = vector.broadcast %28 : vector<1x256xf32> to vector<8x256xf32>
    %30 = arith.mulf %27, %29 : vector<8x256xf32>
    %c239_i32 = arith.constant 239 : i32
    %31 = tpu.dynamic_rotate %1 by %c239_i32 dim 1 : vector<8x256xf32>, i32 -> vector<8x256xf32>
    %c8 = arith.constant 8 : index
    %c0_12 = arith.constant 0 : index
    %32 = vector.load %arg2[%c8, %c0_12] : memref<9x256xf32, #tpu.memory_space<vmem>>, vector<1x256xf32>
    %33 = vector.broadcast %32 : vector<1x256xf32> to vector<8x256xf32>
    %34 = arith.mulf %31, %33 : vector<8x256xf32>
    %35 = tpu.concatenate %6, %10, %14, %18, %1, %22, %26, %30, %34 in 0 : vector<8x256xf32>, vector<8x256xf32>, vector<8x256xf32>, vector<8x256xf32>, vector<8x256xf32>, vector<8x256xf32>, vector<8x256xf32>, vector<8x256xf32>, vector<8x256xf32> -> vector<72x256xf32>
    %cst = arith.constant dense<0.000000e+00> : vector<8x256xf32>
    %36 = tpu.matmul %2, %35, %cst {dimension_numbers = #tpu.dot_dimension_numbers<[1], [0], [0], [1], [0, 0, 1, 1], [], []>} : vector<8x72xf32>, vector<72x256xf32>, vector<8x256xf32> -> vector<8x256xf32>
    %c0_13 = arith.constant 0 : index
    %c0_14 = arith.constant 0 : index
    %37 = vector.load %arg4[%c0_13, %c0_14] : memref<8x1xf32, #tpu.memory_space<vmem>>, vector<8x1xf32>
    %38 = vector.broadcast %37 : vector<8x1xf32> to vector<8x256xf32>
    %39 = arith.mulf %36, %38 : vector<8x256xf32>
    %c0_15 = arith.constant 0 : index
    %c0_16 = arith.constant 0 : index
    %40 = vector.load %arg5[%c0_15, %c0_16] : memref<8x1xf32, #tpu.memory_space<vmem>>, vector<8x1xf32>
    %41 = vector.broadcast %40 : vector<8x1xf32> to vector<8x256xf32>
    %42 = arith.addf %39, %41 : vector<8x256xf32>
    %cst_17 = arith.constant 0.000000e+00 : f32
    %43 = vector.broadcast %cst_17 : f32 to vector<8x256xf32>
    %44 = arith.maximumf %42, %43 : vector<8x256xf32>
    %c0_18 = arith.constant 0 : index
    %c0_19 = arith.constant 0 : index
    %45 = vector.load %arg6[%c0_18, %c0_19] : memref<8x72xf32, #tpu.memory_space<vmem>>, vector<8x72xf32>
    %c17_i32_20 = arith.constant 17 : i32
    %46 = tpu.dynamic_rotate %44 by %c17_i32_20 dim 1 : vector<8x256xf32>, i32 -> vector<8x256xf32>
    %c0_21 = arith.constant 0 : index
    %c0_22 = arith.constant 0 : index
    %47 = vector.load %arg2[%c0_21, %c0_22] : memref<9x256xf32, #tpu.memory_space<vmem>>, vector<1x256xf32>
    %48 = vector.broadcast %47 : vector<1x256xf32> to vector<8x256xf32>
    %49 = arith.mulf %46, %48 : vector<8x256xf32>
    %c16_i32_23 = arith.constant 16 : i32
    %50 = tpu.dynamic_rotate %44 by %c16_i32_23 dim 1 : vector<8x256xf32>, i32 -> vector<8x256xf32>
    %c1_24 = arith.constant 1 : index
    %c0_25 = arith.constant 0 : index
    %51 = vector.load %arg2[%c1_24, %c0_25] : memref<9x256xf32, #tpu.memory_space<vmem>>, vector<1x256xf32>
    %52 = vector.broadcast %51 : vector<1x256xf32> to vector<8x256xf32>
    %53 = arith.mulf %50, %52 : vector<8x256xf32>
    %c15_i32_26 = arith.constant 15 : i32
    %54 = tpu.dynamic_rotate %44 by %c15_i32_26 dim 1 : vector<8x256xf32>, i32 -> vector<8x256xf32>
    %c2_27 = arith.constant 2 : index
    %c0_28 = arith.constant 0 : index
    %55 = vector.load %arg2[%c2_27, %c0_28] : memref<9x256xf32, #tpu.memory_space<vmem>>, vector<1x256xf32>
    %56 = vector.broadcast %55 : vector<1x256xf32> to vector<8x256xf32>
    %57 = arith.mulf %54, %56 : vector<8x256xf32>
    %c1_i32_29 = arith.constant 1 : i32
    %58 = tpu.dynamic_rotate %44 by %c1_i32_29 dim 1 : vector<8x256xf32>, i32 -> vector<8x256xf32>
    %c3_30 = arith.constant 3 : index
    %c0_31 = arith.constant 0 : index
    %59 = vector.load %arg2[%c3_30, %c0_31] : memref<9x256xf32, #tpu.memory_space<vmem>>, vector<1x256xf32>
    %60 = vector.broadcast %59 : vector<1x256xf32> to vector<8x256xf32>
    %61 = arith.mulf %58, %60 : vector<8x256xf32>
    %c255_i32_32 = arith.constant 255 : i32
    %62 = tpu.dynamic_rotate %44 by %c255_i32_32 dim 1 : vector<8x256xf32>, i32 -> vector<8x256xf32>
    %c5_33 = arith.constant 5 : index
    %c0_34 = arith.constant 0 : index
    %63 = vector.load %arg2[%c5_33, %c0_34] : memref<9x256xf32, #tpu.memory_space<vmem>>, vector<1x256xf32>
    %64 = vector.broadcast %63 : vector<1x256xf32> to vector<8x256xf32>
    %65 = arith.mulf %62, %64 : vector<8x256xf32>
    %c241_i32_35 = arith.constant 241 : i32
    %66 = tpu.dynamic_rotate %44 by %c241_i32_35 dim 1 : vector<8x256xf32>, i32 -> vector<8x256xf32>
    %c6_36 = arith.constant 6 : index
    %c0_37 = arith.constant 0 : index
    %67 = vector.load %arg2[%c6_36, %c0_37] : memref<9x256xf32, #tpu.memory_space<vmem>>, vector<1x256xf32>
    %68 = vector.broadcast %67 : vector<1x256xf32> to vector<8x256xf32>
    %69 = arith.mulf %66, %68 : vector<8x256xf32>
    %c240_i32_38 = arith.constant 240 : i32
    %70 = tpu.dynamic_rotate %44 by %c240_i32_38 dim 1 : vector<8x256xf32>, i32 -> vector<8x256xf32>
    %c7_39 = arith.constant 7 : index
    %c0_40 = arith.constant 0 : index
    %71 = vector.load %arg2[%c7_39, %c0_40] : memref<9x256xf32, #tpu.memory_space<vmem>>, vector<1x256xf32>
    %72 = vector.broadcast %71 : vector<1x256xf32> to vector<8x256xf32>
    %73 = arith.mulf %70, %72 : vector<8x256xf32>
    %c239_i32_41 = arith.constant 239 : i32
    %74 = tpu.dynamic_rotate %44 by %c239_i32_41 dim 1 : vector<8x256xf32>, i32 -> vector<8x256xf32>
    %c8_42 = arith.constant 8 : index
    %c0_43 = arith.constant 0 : index
    %75 = vector.load %arg2[%c8_42, %c0_43] : memref<9x256xf32, #tpu.memory_space<vmem>>, vector<1x256xf32>
    %76 = vector.broadcast %75 : vector<1x256xf32> to vector<8x256xf32>
    %77 = arith.mulf %74, %76 : vector<8x256xf32>
    %78 = tpu.concatenate %49, %53, %57, %61, %44, %65, %69, %73, %77 in 0 : vector<8x256xf32>, vector<8x256xf32>, vector<8x256xf32>, vector<8x256xf32>, vector<8x256xf32>, vector<8x256xf32>, vector<8x256xf32>, vector<8x256xf32>, vector<8x256xf32> -> vector<72x256xf32>
    %cst_44 = arith.constant dense<0.000000e+00> : vector<8x256xf32>
    %79 = tpu.matmul %45, %78, %cst_44 {dimension_numbers = #tpu.dot_dimension_numbers<[1], [0], [0], [1], [0, 0, 1, 1], [], []>} : vector<8x72xf32>, vector<72x256xf32>, vector<8x256xf32> -> vector<8x256xf32>
    %c0_45 = arith.constant 0 : index
    %c0_46 = arith.constant 0 : index
    %80 = vector.load %arg7[%c0_45, %c0_46] : memref<8x1xf32, #tpu.memory_space<vmem>>, vector<8x1xf32>
    %81 = vector.broadcast %80 : vector<8x1xf32> to vector<8x256xf32>
    %82 = arith.mulf %79, %81 : vector<8x256xf32>
    %c0_47 = arith.constant 0 : index
    %c0_48 = arith.constant 0 : index
    %83 = vector.load %arg8[%c0_47, %c0_48] : memref<8x1xf32, #tpu.memory_space<vmem>>, vector<8x1xf32>
    %84 = vector.broadcast %83 : vector<8x1xf32> to vector<8x256xf32>
    %85 = arith.addf %82, %84 : vector<8x256xf32>
    %cst_49 = arith.constant 0.000000e+00 : f32
    %86 = vector.broadcast %cst_49 : f32 to vector<8x256xf32>
    %87 = arith.maximumf %85, %86 : vector<8x256xf32>
    %c0_50 = arith.constant 0 : index
    %c0_51 = arith.constant 0 : index
    %88 = vector.load %arg9[%c0_50, %c0_51] : memref<16x8xf32, #tpu.memory_space<vmem>>, vector<16x8xf32>
    %cst_52 = arith.constant dense<0.000000e+00> : vector<16x256xf32>
    %89 = tpu.matmul %88, %87, %cst_52 {dimension_numbers = #tpu.dot_dimension_numbers<[1], [0], [0], [1], [0, 0, 1, 1], [], []>} : vector<16x8xf32>, vector<8x256xf32>, vector<16x256xf32> -> vector<16x256xf32>
    %c0_53 = arith.constant 0 : index
    %c0_54 = arith.constant 0 : index
    %90 = vector.load %arg10[%c0_53, %c0_54] : memref<16x1xf32, #tpu.memory_space<vmem>>, vector<16x1xf32>
    %91 = vector.broadcast %90 : vector<16x1xf32> to vector<16x256xf32>
    %92 = arith.addf %89, %91 : vector<16x256xf32>
    %c0_55 = arith.constant 0 : index
    %c0_56 = arith.constant 0 : index
    %c0_57 = arith.constant 0 : index
    %93 = vector.load %arg11[%c0_55, %c0_56, %c0_57] : memref<1x16x256xf32, #tpu.memory_space<vmem>>, vector<1x16x256xf32>
    %94 = vector.shape_cast %93 : vector<1x16x256xf32> to vector<16x256xf32>
    %95 = vector.shape_cast %92 : vector<16x256xf32> to vector<1x16x256xf32>
    tpu.vector_store %arg11[%c0_55, %c0_56, %c0_57], %95 {strides = array<i32>} : memref<1x16x256xf32, #tpu.memory_space<vmem>>, vector<1x16x256xf32>,
    return
  }
  func.func @transform_0(%arg0: i32) -> (i32, i32, i32) {
    %c0_i32 = arith.constant 0 : i32
    %c0_i32_0 = arith.constant 0 : i32
    %c0_i32_1 = arith.constant 0 : i32
    return %arg0, %c0_i32, %c0_i32_0 : i32, i32, i32
  }
  func.func @transform_1(%arg0: i32) -> (i32, i32) {
    %c0_i32 = arith.constant 0 : i32
    %c0_i32_0 = arith.constant 0 : i32
    %c0_i32_1 = arith.constant 0 : i32
    return %c0_i32, %c0_i32_0 : i32, i32
  }
  func.func @transform_2(%arg0: i32) -> (i32, i32) {
    %c0_i32 = arith.constant 0 : i32
    %c0_i32_0 = arith.constant 0 : i32
    %c0_i32_1 = arith.constant 0 : i32
    return %c0_i32, %c0_i32_0 : i32, i32
  }
  func.func @transform_3(%arg0: i32) -> (i32, i32) {
    %c0_i32 = arith.constant 0 : i32
    %c0_i32_0 = arith.constant 0 : i32
    %c0_i32_1 = arith.constant 0 : i32
    return %c0_i32, %c0_i32_0 : i32, i32
  }
  func.func @transform_4(%arg0: i32) -> (i32, i32) {
    %c0_i32 = arith.constant 0 : i32
    %c0_i32_0 = arith.constant 0 : i32
    %c0_i32_1 = arith.constant 0 : i32
    return %c0_i32, %c0_i32_0 : i32, i32
  }
  func.func @transform_5(%arg0: i32) -> (i32, i32) {
    %c0_i32 = arith.constant 0 : i32
    %c0_i32_0 = arith.constant 0 : i32
    %c0_i32_1 = arith.constant 0 : i32
    return %c0_i32, %c0_i32_0 : i32, i32
  }
  func.func @transform_6(%arg0: i32) -> (i32, i32) {
    %c0_i32 = arith.constant 0 : i32
    %c0_i32_0 = arith.constant 0 : i32
    %c0_i32_1 = arith.constant 0 : i32
    return %c0_i32, %c0_i32_0 : i32, i32
  }
  func.func @transform_7(%arg0: i32) -> (i32, i32) {
    %c0_i32 = arith.constant 0 : i32
    %c0_i32_0 = arith.constant 0 : i32
    %c0_i32_1 = arith.constant 0 : i32
    return %c0_i32, %c0_i32_0 : i32, i32
  }
  func.func @transform_8(%arg0: i32) -> (i32, i32) {
    %c0_i32 = arith.constant 0 : i32
    %c0_i32_0 = arith.constant 0 : i32
    %c0_i32_1 = arith.constant 0 : i32
    return %c0_i32, %c0_i32_0 : i32, i32
  }
  func.func @transform_9(%arg0: i32) -> (i32, i32) {
    %c0_i32 = arith.constant 0 : i32
    %c0_i32_0 = arith.constant 0 : i32
    %c0_i32_1 = arith.constant 0 : i32
    return %c0_i32, %c0_i32_0 : i32, i32
  }
  func.func @transform_10(%arg0: i32) -> (i32, i32, i32) {
    %c0_i32 = arith.constant 0 : i32
    %c0_i32_0 = arith.constant 0 : i32
    %c0_i32_1 = arith.constant 0 : i32
    return %arg0, %c0_i32, %c0_i32_0 : i32, i32, i32
  }
}

</mosaic_0001>

<llo_original>
// kernel: tpu_custom_call.1
$region0: #{tpu_custom_call.1}
  #allocation0 [shape = 'u32[]', space=smem, size = 0x4, offset = 0x4, fixed_abs, tag = 'smem constant byte address 0x4 - core index']
  #allocation1 [shape = 'u32[144,128]{1,0:T(1,128)}', space=vmem, size = 0x12000, scoped, tag = 'internal scratch']
  %s0 = inlined_call_operand.vmem [shape: f32[2,8,256], index: 0, kind: input, shape index: {}]
  %s1 = inlined_call_operand.vmem [shape: f32[9,256], index: 1, kind: input, shape index: {}]
  %s2 = inlined_call_operand.vmem [shape: f32[8,72], index: 2, kind: input, shape index: {}]
  %s3 = inlined_call_operand.vmem [shape: f32[8,1], index: 3, kind: input, shape index: {}]
  %s4 = inlined_call_operand.vmem [shape: f32[8,1], index: 4, kind: input, shape index: {}]
  %s5 = inlined_call_operand.vmem [shape: f32[8,72], index: 5, kind: input, shape index: {}]
  %s6 = inlined_call_operand.vmem [shape: f32[8,1], index: 6, kind: input, shape index: {}]
  %s7 = inlined_call_operand.vmem [shape: f32[8,1], index: 7, kind: input, shape index: {}]
  %s8 = inlined_call_operand.vmem [shape: f32[16,8], index: 8, kind: input, shape index: {}]
  %s9 = inlined_call_operand.vmem [shape: f32[16,1], index: 9, kind: input, shape index: {}]
  %s10 = inlined_call_operand.hbm [shape: f32[2,16,256], index: 10, kind: output, shape index: {}]
  %s11 = sld [smem:[#allocation0]]
  $region73: #{tpu_custom_call.1} parent=0
    _
  %s13 = ssub.s32 1, %s11
  %s14 = scalar_select 0, %s13, %s11
  $region1: #{tpu_custom_call.1} parent=0
    #allocation2 [shape = 'u8[32768]{0}', space=vmem, size = 0x8000, scoped, tag = 'output window, operand 0']
    #allocation3 [shape = 's32[2]{0}', space=sflag, size = 0x8, scoped, tag = 'scoped memory for tpu_custom_call.1']
    %15 = vsyncpa [#allocation3], 0
    %s16 = scalar_lea.sflag [#allocation3], 1
    %17 = vsyncpa %s16, 0
    loop: start=0, step=1, limit=4
    $region2: #{tpu_custom_call.1} parent=1 // loop_pre_header
      _
    $region3: #{tpu_custom_call.1} parent=1 // loop_header
      %s19 = sphi 0, %s23
      %p20 = scmp.ge.s32.totalorder %s19, 4
      %s29 = sphi 0, %s31
      %s32 = sphi 0, %s29
      %s33 = sphi 0, %s32
      %s49 = sphi 0, %s33
      %s53 = sphi 0, %s53
      %s55 = sphi 0, %s53
      %s56 = sphi 0, %s55
      %s70 = sphi 0, %s56
      %s74 = sphi 0, %s74
      %s76 = sphi 0, %s74
      %s77 = sphi 0, %s76
      %s91 = sphi 0, %s77
      %s95 = sphi 0, %s95
      %s97 = sphi 0, %s95
      %s98 = sphi 0, %s97
      %s112 = sphi 0, %s98
      %s116 = sphi 0, %s116
      %s118 = sphi 0, %s116
      %s119 = sphi 0, %s118
      %s133 = sphi 0, %s119
      %s137 = sphi 0, %s137
      %s139 = sphi 0, %s137
      %s140 = sphi 0, %s139
      %s154 = sphi 0, %s140
      %s158 = sphi 0, %s158
      %s160 = sphi 0, %s158
      %s161 = sphi 0, %s160
      %s175 = sphi 0, %s161
      %s179 = sphi 0, %s179
      %s181 = sphi 0, %s179
      %s182 = sphi 0, %s181
      %s196 = sphi 0, %s182
      %s200 = sphi 0, %s200
      %s202 = sphi 0, %s200
      %s203 = sphi 0, %s202
      %s217 = sphi 0, %s203
      %s221 = sphi 0, %s221
      %s223 = sphi 0, %s221
      %s224 = sphi 0, %s223
      %s238 = sphi 0, %s224
      %s244 = sphi 0, %s246
      %s247 = sphi 0, %s244
      %s248 = sphi 0, %s247
      %s264 = sphi 0, %s248
    $region4: #{tpu_custom_call.1} parent=1 // loop_header_branch
      %22 = sbr.rel (%p20) target = $region8
    $region5: #{tpu_custom_call.1} parent=1 // loop_body
      %s24 = ssub.s32 %s19, 1
      %s25 = ssub.s32 %s19, 2
      %s26 = sadd.s32 %s19, 1
      %s27 = ssub.s32 %s19, %s26
      %p28 = scmp.eq.s32.totalorder %s27, 0
      %s30 = sadd.s32 %s29, 1
      %s31 = scalar_select %p28, %s29, %s30
      %p34 = pneg %p28
      %p35 = scmp.eq.s32.totalorder %s19, 1
      %p36 = por %p34, %p35
      %p37 = scmp.ne.s32.totalorder %s29, %s32
      %p38 = scmp.eq.s32.totalorder %s19, 0
      %p39 = por %p37, %p38
      %p40 = scmp.ne.s32.totalorder %s29, %s32
      %p41 = scmp.eq.s32.totalorder %s24, 1
      %p42 = por %p40, %p41
      %p43 = scmp.ne.s32.totalorder %s32, %s33
      %p44 = scmp.eq.s32.totalorder %s24, 0
      %p45 = por %p43, %p44
      %p46 = scmp.ne.s32.totalorder %s32, %s33
      %p47 = scmp.eq.s32.totalorder %s25, 1
      %p48 = por %p46, %p47
      %p50 = scmp.ne.s32.totalorder %s33, %s49
      %p51 = scmp.eq.s32.totalorder %s25, 0
      %p52 = por %p50, %p51
      %s54 = sadd.s32 %s53, 1
      %p57 = scmp.eq.s32.totalorder %s19, 1
      %p58 = scmp.ne.s32.totalorder %s53, %s55
      %p59 = scmp.eq.s32.totalorder %s19, 0
      %p60 = por %p58, %p59
      %p61 = scmp.ne.s32.totalorder %s53, %s55
      %p62 = scmp.eq.s32.totalorder %s24, 1
      %p63 = por %p61, %p62
      %p64 = scmp.ne.s32.totalorder %s55, %s56
      %p65 = scmp.eq.s32.totalorder %s24, 0
      %p66 = por %p64, %p65
      %p67 = scmp.ne.s32.totalorder %s55, %s56
      %p68 = scmp.eq.s32.totalorder %s25, 1
      %p69 = por %p67, %p68
      %p71 = scmp.ne.s32.totalorder %s56, %s70
      %p72 = scmp.eq.s32.totalorder %s25, 0
      %p73 = por %p71, %p72
      %s75 = sadd.s32 %s74, 1
      %p78 = scmp.eq.s32.totalorder %s19, 1
      %p79 = scmp.ne.s32.totalorder %s74, %s76
      %p80 = scmp.eq.s32.totalorder %s19, 0
      %p81 = por %p79, %p80
      %p82 = scmp.ne.s32.totalorder %s74, %s76
      %p83 = scmp.eq.s32.totalorder %s24, 1
      %p84 = por %p82, %p83
      %p85 = scmp.ne.s32.totalorder %s76, %s77
      %p86 = scmp.eq.s32.totalorder %s24, 0
      %p87 = por %p85, %p86
      %p88 = scmp.ne.s32.totalorder %s76, %s77
      %p89 = scmp.eq.s32.totalorder %s25, 1
      %p90 = por %p88, %p89
      %p92 = scmp.ne.s32.totalorder %s77, %s91
      %p93 = scmp.eq.s32.totalorder %s25, 0
      %p94 = por %p92, %p93
      %s96 = sadd.s32 %s95, 1
      %p99 = scmp.eq.s32.totalorder %s19, 1
      %p100 = scmp.ne.s32.totalorder %s95, %s97
      %p101 = scmp.eq.s32.totalorder %s19, 0
      %p102 = por %p100, %p101
      %p103 = scmp.ne.s32.totalorder %s95, %s97
      %p104 = scmp.eq.s32.totalorder %s24, 1
      %p105 = por %p103, %p104
      %p106 = scmp.ne.s32.totalorder %s97, %s98
      %p107 = scmp.eq.s32.totalorder %s24, 0
      %p108 = por %p106, %p107
      %p109 = scmp.ne.s32.totalorder %s97, %s98
      %p110 = scmp.eq.s32.totalorder %s25, 1
      %p111 = por %p109, %p110
      %p113 = scmp.ne.s32.totalorder %s98, %s112
      %p114 = scmp.eq.s32.totalorder %s25, 0
      %p115 = por %p113, %p114
      %s117 = sadd.s32 %s116, 1
      %p120 = scmp.eq.s32.totalorder %s19, 1
      %p121 = scmp.ne.s32.totalorder %s116, %s118
      %p122 = scmp.eq.s32.totalorder %s19, 0
      %p123 = por %p121, %p122
      %p124 = scmp.ne.s32.totalorder %s116, %s118
      %p125 = scmp.eq.s32.totalorder %s24, 1
      %p126 = por %p124, %p125
      %p127 = scmp.ne.s32.totalorder %s118, %s119
      %p128 = scmp.eq.s32.totalorder %s24, 0
      %p129 = por %p127, %p128
      %p130 = scmp.ne.s32.totalorder %s118, %s119
      %p131 = scmp.eq.s32.totalorder %s25, 1
      %p132 = por %p130, %p131
      %p134 = scmp.ne.s32.totalorder %s119, %s133
      %p135 = scmp.eq.s32.totalorder %s25, 0
      %p136 = por %p134, %p135
      %s138 = sadd.s32 %s137, 1
      %p141 = scmp.eq.s32.totalorder %s19, 1
      %p142 = scmp.ne.s32.totalorder %s137, %s139
      %p143 = scmp.eq.s32.totalorder %s19, 0
      %p144 = por %p142, %p143
      %p145 = scmp.ne.s32.totalorder %s137, %s139
      %p146 = scmp.eq.s32.totalorder %s24, 1
      %p147 = por %p145, %p146
      %p148 = scmp.ne.s32.totalorder %s139, %s140
      %p149 = scmp.eq.s32.totalorder %s24, 0
      %p150 = por %p148, %p149
      %p151 = scmp.ne.s32.totalorder %s139, %s140
      %p152 = scmp.eq.s32.totalorder %s25, 1
      %p153 = por %p151, %p152
      %p155 = scmp.ne.s32.totalorder %s140, %s154
      %p156 = scmp.eq.s32.totalorder %s25, 0
      %p157 = por %p155, %p156
      %s159 = sadd.s32 %s158, 1
      %p162 = scmp.eq.s32.totalorder %s19, 1
      %p163 = scmp.ne.s32.totalorder %s158, %s160
      %p164 = scmp.eq.s32.totalorder %s19, 0
      %p165 = por %p163, %p164
      %p166 = scmp.ne.s32.totalorder %s158, %s160
      %p167 = scmp.eq.s32.totalorder %s24, 1
      %p168 = por %p166, %p167
      %p169 = scmp.ne.s32.totalorder %s160, %s161
      %p170 = scmp.eq.s32.totalorder %s24, 0
      %p171 = por %p169, %p170
      %p172 = scmp.ne.s32.totalorder %s160, %s161
      %p173 = scmp.eq.s32.totalorder %s25, 1
      %p174 = por %p172, %p173
      %p176 = scmp.ne.s32.totalorder %s161, %s175
      %p177 = scmp.eq.s32.totalorder %s25, 0
      %p178 = por %p176, %p177
      %s180 = sadd.s32 %s179, 1
      %p183 = scmp.eq.s32.totalorder %s19, 1
      %p184 = scmp.ne.s32.totalorder %s179, %s181
      %p185 = scmp.eq.s32.totalorder %s19, 0
      %p186 = por %p184, %p185
      %p187 = scmp.ne.s32.totalorder %s179, %s181
      %p188 = scmp.eq.s32.totalorder %s24, 1
      %p189 = por %p187, %p188
      %p190 = scmp.ne.s32.totalorder %s181, %s182
      %p191 = scmp.eq.s32.totalorder %s24, 0
      %p192 = por %p190, %p191
      %p193 = scmp.ne.s32.totalorder %s181, %s182
      %p194 = scmp.eq.s32.totalorder %s25, 1
      %p195 = por %p193, %p194
      %p197 = scmp.ne.s32.totalorder %s182, %s196
      %p198 = scmp.eq.s32.totalorder %s25, 0
      %p199 = por %p197, %p198
      %s201 = sadd.s32 %s200, 1
      %p204 = scmp.eq.s32.totalorder %s19, 1
      %p205 = scmp.ne.s32.totalorder %s200, %s202
      %p206 = scmp.eq.s32.totalorder %s19, 0
      %p207 = por %p205, %p206
      %p208 = scmp.ne.s32.totalorder %s200, %s202
      %p209 = scmp.eq.s32.totalorder %s24, 1
      %p210 = por %p208, %p209
      %p211 = scmp.ne.s32.totalorder %s202, %s203
      %p212 = scmp.eq.s32.totalorder %s24, 0
      %p213 = por %p211, %p212
      %p214 = scmp.ne.s32.totalorder %s202, %s203
      %p215 = scmp.eq.s32.totalorder %s25, 1
      %p216 = por %p214, %p215
      %p218 = scmp.ne.s32.totalorder %s203, %s217
      %p219 = scmp.eq.s32.totalorder %s25, 0
      %p220 = por %p218, %p219
      %s222 = sadd.s32 %s221, 1
      %p225 = scmp.eq.s32.totalorder %s19, 1
      %p226 = scmp.ne.s32.totalorder %s221, %s223
      %p227 = scmp.eq.s32.totalorder %s19, 0
      %p228 = por %p226, %p227
      %p229 = scmp.ne.s32.totalorder %s221, %s223
      %p230 = scmp.eq.s32.totalorder %s24, 1
      %p231 = por %p229, %p230
      %p232 = scmp.ne.s32.totalorder %s223, %s224
      %p233 = scmp.eq.s32.totalorder %s24, 0
      %p234 = por %p232, %p233
      %p235 = scmp.ne.s32.totalorder %s223, %s224
      %p236 = scmp.eq.s32.totalorder %s25, 1
      %p237 = por %p235, %p236
      %p239 = scmp.ne.s32.totalorder %s224, %s238
      %p240 = scmp.eq.s32.totalorder %s25, 0
      %p241 = por %p239, %p240
      %s242 = ssub.s32 %s19, %s26
      %p243 = scmp.eq.s32.totalorder %s242, 0
      %s245 = sadd.s32 %s244, 1
      %s246 = scalar_select %p243, %s244, %s245
      %p249 = pneg %p243
      %p250 = scmp.eq.s32.totalorder %s19, 1
      %p251 = por %p249, %p250
      %p252 = scmp.ne.s32.totalorder %s244, %s247
      %p253 = scmp.eq.s32.totalorder %s19, 0
      %p254 = por %p252, %p253
      %p255 = scmp.ne.s32.totalorder %s244, %s247
      %p256 = scmp.eq.s32.totalorder %s24, 1
      %p257 = por %p255, %p256
      %p258 = scmp.ne.s32.totalorder %s247, %s248
      %p259 = scmp.eq.s32.totalorder %s24, 0
      %p260 = por %p258, %p259
      %p261 = scmp.ne.s32.totalorder %s247, %s248
      %p262 = scmp.eq.s32.totalorder %s25, 1
      %p263 = por %p261, %p262
      %p265 = scmp.ne.s32.totalorder %s248, %s264
      %p266 = scmp.eq.s32.totalorder %s25, 0
      %p267 = por %p265, %p266
      %p268 = scmp.le.s32.totalorder 1, %s19
      %p269 = scmp.lt.s32.totalorder %s19, 3
      %p270 = pnand %p268, %p269
      %p271 = pneg %p270
      // Predicated region
      $region9: #{tpu_custom_call.1} parent=5 // pred_check
        _
      $region10: #{tpu_custom_call.1} parent=5 // pred_check_branch
        %273 = sbr.rel (%p270) target = $region12
      $region11: #{tpu_custom_call.1} parent=5 // pred_region
        %s274 = ssub.s32 %s19, 1
        // Predicated region
        $region13: #{tpu_custom_call.1} parent=11 // pred_check
          %p275 = pneg %p66
        $region14: #{tpu_custom_call.1} parent=11 // pred_check_branch
          %277 = sbr.rel (%p275) target = $region16
        $region15: #{tpu_custom_call.1} parent=11 // pred_region
          _
        $region16: #{tpu_custom_call.1} parent=11 // pred_fallthru
          _
        // Predicated region
        $region17: #{tpu_custom_call.1} parent=11 // pred_check
          %p278 = pneg %p87
        $region18: #{tpu_custom_call.1} parent=11 // pred_check_branch
          %280 = sbr.rel (%p278) target = $region20
        $region19: #{tpu_custom_call.1} parent=11 // pred_region
          _
        $region20: #{tpu_custom_call.1} parent=11 // pred_fallthru
          _
        // Predicated region
        $region21: #{tpu_custom_call.1} parent=11 // pred_check
          %p281 = pneg %p108
        $region22: #{tpu_custom_call.1} parent=11 // pred_check_branch
          %283 = sbr.rel (%p281) target = $region24
        $region23: #{tpu_custom_call.1} parent=11 // pred_region
          _
        $region24: #{tpu_custom_call.1} parent=11 // pred_fallthru
          _
        // Predicated region
        $region25: #{tpu_custom_call.1} parent=11 // pred_check
          %p284 = pneg %p129
        $region26: #{tpu_custom_call.1} parent=11 // pred_check_branch
          %286 = sbr.rel (%p284) target = $region28
        $region27: #{tpu_custom_call.1} parent=11 // pred_region
          _
        $region28: #{tpu_custom_call.1} parent=11 // pred_fallthru
          _
        // Predicated region
        $region29: #{tpu_custom_call.1} parent=11 // pred_check
          %p287 = pneg %p150
        $region30: #{tpu_custom_call.1} parent=11 // pred_check_branch
          %289 = sbr.rel (%p287) target = $region32
        $region31: #{tpu_custom_call.1} parent=11 // pred_region
          _
        $region32: #{tpu_custom_call.1} parent=11 // pred_fallthru
          _
        // Predicated region
        $region33: #{tpu_custom_call.1} parent=11 // pred_check
          %p290 = pneg %p171
        $region34: #{tpu_custom_call.1} parent=11 // pred_check_branch
          %292 = sbr.rel (%p290) target = $region36
        $region35: #{tpu_custom_call.1} parent=11 // pred_region
          _
        $region36: #{tpu_custom_call.1} parent=11 // pred_fallthru
          _
        // Predicated region
        $region37: #{tpu_custom_call.1} parent=11 // pred_check
          %p293 = pneg %p192
        $region38: #{tpu_custom_call.1} parent=11 // pred_check_branch
          %295 = sbr.rel (%p293) target = $region40
        $region39: #{tpu_custom_call.1} parent=11 // pred_region
          _
        $region40: #{tpu_custom_call.1} parent=11 // pred_fallthru
          _
        // Predicated region
        $region41: #{tpu_custom_call.1} parent=11 // pred_check
          %p296 = pneg %p213
        $region42: #{tpu_custom_call.1} parent=11 // pred_check_branch
          %298 = sbr.rel (%p296) target = $region44
        $region43: #{tpu_custom_call.1} parent=11 // pred_region
          _
        $region44: #{tpu_custom_call.1} parent=11 // pred_fallthru
          _
        // Predicated region
        $region45: #{tpu_custom_call.1} parent=11 // pred_check
          %p299 = pneg %p234
        $region46: #{tpu_custom_call.1} parent=11 // pred_check_branch
          %301 = sbr.rel (%p299) target = $region48
        $region47: #{tpu_custom_call.1} parent=11 // pred_region
          _
        $region48: #{tpu_custom_call.1} parent=11 // pred_fallthru
          _
      $region12: #{tpu_custom_call.1} parent=5 // pred_fallthru
        _
      %p302 = scmp.lt.s32.totalorder %s19, 2
      // Predicated region
      $region49: #{tpu_custom_call.1} parent=5 // pred_check
        %p303 = pneg %p302
      $region50: #{tpu_custom_call.1} parent=5 // pred_check_branch
        %305 = sbr.rel (%p303) target = $region52
      $region51: #{tpu_custom_call.1} parent=5 // pred_region
        // Predicated region
        $region53: #{tpu_custom_call.1} parent=51 // pred_check
          %p306 = pneg %p39
        $region54: #{tpu_custom_call.1} parent=51 // pred_check_branch
          %308 = sbr.rel (%p306) target = $region56
        $region55: #{tpu_custom_call.1} parent=51 // pred_region
          %p309 = scmp.lt.s32.totalorder %s19, 1
          %s310 = scalar_select %p309, %s19, 1
          %s311 = smul.addr %s310, 2
          %s312 = smul.addr %s311, 8
          %s313 = scalar_lea.vmem %s0, %s312
        $region56: #{tpu_custom_call.1} parent=51 // pred_fallthru
          _
      $region52: #{tpu_custom_call.1} parent=5 // pred_fallthru
        _
      %p314 = scmp.le.s32.totalorder 1, %s19
      %p315 = scmp.lt.s32.totalorder %s19, 3
      %p316 = pnand %p314, %p315
      %p317 = pneg %p316
      // Predicated region
      $region57: #{tpu_custom_call.1} parent=5 // pred_check
        _
      $region58: #{tpu_custom_call.1} parent=5 // pred_check_branch
        %319 = sbr.rel (%p316) target = $region60
      $region59: #{tpu_custom_call.1} parent=5 // pred_region
        %s320 = ssub.s32 %s19, 1
        %p321 = scmp.lt.s32.totalorder %s24, 1
        %s322 = scalar_select %p321, %s24, 1
        %s323 = smul.addr %s322, 2
        %s324 = smul.addr %s323, 8
        %s325 = scalar_lea.vmem %s0, %s324
        %p326 = pneg %p45
        %p327 = pneg %p42
        %p328 = pneg %p66
        %p329 = pneg %p63
        %p330 = pneg %p87
        %p331 = pneg %p84
        %p332 = pneg %p108
        %p333 = pneg %p105
        %p334 = pneg %p129
        %p335 = pneg %p126
        %p336 = pneg %p150
        %p337 = pneg %p147
        %p338 = pneg %p171
        %p339 = pneg %p168
        %p340 = pneg %p192
        %p341 = pneg %p189
        %p342 = pneg %p213
        %p343 = pneg %p210
        %p344 = pneg %p234
        %p345 = pneg %p231
        %p346 = pneg %p260
        %p347 = pneg %p257
        %s348 = sand.u32 %s247, 1
        %s349 = scalar_lea.sflag [#allocation3], %s348
        %s350 = sand.u32 %s247, 1
        %s351 = smul.addr %s350, 32
        %s352 = scalar_lea.vmem [#allocation2], %s351
        %p353 = scmp.lt.s32.totalorder %s24, 1
        %s354 = scalar_select %p353, %s24, 1
        %s355 = smul.addr %s354, 2
        %s356 = smul.addr %s355, 8
        %s357 = scalar_lea.vmem %s0, %s356
        %v358 = vld [vmem:[%s357] sm:$0xff]
        %v359 = vld [vmem:[%s357 + $0x8] sm:$0xff]
        %v360 = vld [vmem:[%s2] sm:$0xff]
        %361 = vrot.lane.b32.xlu0 %v358, 17
        %v362 = vpop.permute.xlu0 %361
        %363 = vrot.lane.b32.xlu0 %v359, 17
        %v364 = vpop.permute.xlu0 %363
        %v365 = vlaneseq
        %v366 = vand.u32 %v365, 127
        %vm367 = vcmp.lt.s32.totalorder %v366, 17
        %v368 = vsel %vm367, %v362, %v364
        %v369 = vsel %vm367, %v364, %v362
        %v370 = vld [vmem:[%s1] ss:$8 sm:$0x3]
        %v372 = vlaneseq
        %v373 = vshrl.u32 %v372, 7
        %v374 = vsub.s32 0, %v373
        %v375 = vrot.slane %v370, %v374
        %v376 = vlaneseq
        %v377 = vshrl.u32 %v376, 7
        %v378 = vsub.s32 1, %v377
        %v379 = vrot.slane %v370, %v378
        %v382 = vmul.f32 %v369, %v375
        %v383 = vmul.f32 %v368, %v379
        %384 = vrot.lane.b32.xlu0 %v358, 16
        %v385 = vpop.permute.xlu0 %384
        %386 = vrot.lane.b32.xlu0 %v359, 16
        %v387 = vpop.permute.xlu0 %386
        %vm388 = vcmp.lt.s32.totalorder %v366, 16
        %v389 = vsel %vm388, %v385, %v387
        %v390 = vsel %vm388, %v387, %v385
        %s391 = scalar_lea.vmem %s1, 1
        %v392 = vld [vmem:[%s391] ss:$8 sm:$0x3]
        %v394 = vlaneseq
        %v395 = vshrl.u32 %v394, 7
        %v396 = vsub.s32 0, %v395
        %v397 = vrot.slane %v392, %v396
        %v398 = vlaneseq
        %v399 = vshrl.u32 %v398, 7
        %v400 = vsub.s32 1, %v399
        %v401 = vrot.slane %v392, %v400
        %v404 = vmul.f32 %v390, %v397
        %v405 = vmul.f32 %v389, %v401
        %406 = vrot.lane.b32.xlu0 %v358, 15
        %v407 = vpop.permute.xlu0 %406
        %408 = vrot.lane.b32.xlu0 %v359, 15
        %v409 = vpop.permute.xlu0 %408
        %vm410 = vcmp.lt.s32.totalorder %v366, 15
        %v411 = vsel %vm410, %v407, %v409
        %v412 = vsel %vm410, %v409, %v407
        %s413 = scalar_lea.vmem %s1, 2
        %v414 = vld [vmem:[%s413] ss:$8 sm:$0x3]
        %v416 = vlaneseq
        %v417 = vshrl.u32 %v416, 7
        %v418 = vsub.s32 0, %v417
        %v419 = vrot.slane %v414, %v418
        %v420 = vlaneseq
        %v421 = vshrl.u32 %v420, 7
        %v422 = vsub.s32 1, %v421
        %v423 = vrot.slane %v414, %v422
        %v426 = vmul.f32 %v412, %v419
        %v427 = vmul.f32 %v411, %v423
        %428 = vrot.lane.b32.xlu0 %v358, 1
        %v429 = vpop.permute.xlu0 %428
        %430 = vrot.lane.b32.xlu0 %v359, 1
        %v431 = vpop.permute.xlu0 %430
        %vm432 = vcmp.lt.s32.totalorder %v366, 1
        %v433 = vsel %vm432, %v429, %v431
        %v434 = vsel %vm432, %v431, %v429
        %s435 = scalar_lea.vmem %s1, 3
        %v436 = vld [vmem:[%s435] ss:$8 sm:$0x3]
        %v438 = vlaneseq
        %v439 = vshrl.u32 %v438, 7
        %v440 = vsub.s32 0, %v439
        %v441 = vrot.slane %v436, %v440
        %v442 = vlaneseq
        %v443 = vshrl.u32 %v442, 7
        %v444 = vsub.s32 1, %v443
        %v445 = vrot.slane %v436, %v444
        %v448 = vmul.f32 %v434, %v441
        %v449 = vmul.f32 %v433, %v445
        %450 = vrot.lane.b32.xlu0 %v358, 127
        %v451 = vpop.permute.xlu0 %450
        %452 = vrot.lane.b32.xlu0 %v359, 127
        %v453 = vpop.permute.xlu0 %452
        %vm454 = vcmp.lt.s32.totalorder %v366, 127
        %v455 = vsel %vm454, %v451, %v453
        %v456 = vsel %vm454, %v453, %v451
        %s457 = scalar_lea.vmem %s1, 5
        %v458 = vld [vmem:[%s457] ss:$8 sm:$0x3]
        %v460 = vlaneseq
        %v461 = vshrl.u32 %v460, 7
        %v462 = vsub.s32 0, %v461
        %v463 = vrot.slane %v458, %v462
        %v464 = vlaneseq
        %v465 = vshrl.u32 %v464, 7
        %v466 = vsub.s32 1, %v465
        %v467 = vrot.slane %v458, %v466
        %v470 = vmul.f32 %v455, %v463
        %v471 = vmul.f32 %v456, %v467
        %472 = vrot.lane.b32.xlu0 %v358, 113
        %v473 = vpop.permute.xlu0 %472
        %474 = vrot.lane.b32.xlu0 %v359, 113
        %v475 = vpop.permute.xlu0 %474
        %vm476 = vcmp.lt.s32.totalorder %v366, 113
        %v477 = vsel %vm476, %v473, %v475
        %v478 = vsel %vm476, %v475, %v473
        %s479 = scalar_lea.vmem %s1, 6
        %v480 = vld [vmem:[%s479] ss:$8 sm:$0x3]
        %v482 = vlaneseq
        %v483 = vshrl.u32 %v482, 7
        %v484 = vsub.s32 0, %v483
        %v485 = vrot.slane %v480, %v484
        %v486 = vlaneseq
        %v487 = vshrl.u32 %v486, 7
        %v488 = vsub.s32 1, %v487
        %v489 = vrot.slane %v480, %v488
        %v492 = vmul.f32 %v477, %v485
        %v493 = vmul.f32 %v478, %v489
        %494 = vrot.lane.b32.xlu0 %v358, 112
        %v495 = vpop.permute.xlu0 %494
        %496 = vrot.lane.b32.xlu0 %v359, 112
        %v497 = vpop.permute.xlu0 %496
        %vm498 = vcmp.lt.s32.totalorder %v366, 112
        %v499 = vsel %vm498, %v495, %v497
        %v500 = vsel %vm498, %v497, %v495
        %s501 = scalar_lea.vmem %s1, 7
        %v502 = vld [vmem:[%s501] ss:$8 sm:$0x3]
        %v504 = vlaneseq
        %v505 = vshrl.u32 %v504, 7
        %v506 = vsub.s32 0, %v505
        %v507 = vrot.slane %v502, %v506
        %v508 = vlaneseq
        %v509 = vshrl.u32 %v508, 7
        %v510 = vsub.s32 1, %v509
        %v511 = vrot.slane %v502, %v510
        %v514 = vmul.f32 %v499, %v507
        %v515 = vmul.f32 %v500, %v511
        %516 = vrot.lane.b32.xlu0 %v358, 111
        %v517 = vpop.permute.xlu0 %516
        %518 = vrot.lane.b32.xlu0 %v359, 111
        %v519 = vpop.permute.xlu0 %518
        %vm520 = vcmp.lt.s32.totalorder %v366, 111
        %v521 = vsel %vm520, %v517, %v519
        %v522 = vsel %vm520, %v519, %v517
        %s523 = scalar_lea.vmem %s1, 16
        %v524 = vld [vmem:[%s523] ss:$8 sm:$0x3]
        %v526 = vlaneseq
        %v527 = vshrl.u32 %v526, 7
        %v528 = vsub.s32 0, %v527
        %v529 = vrot.slane %v524, %v528
        %v530 = vlaneseq
        %v531 = vshrl.u32 %v530, 7
        %v532 = vsub.s32 1, %v531
        %v533 = vrot.slane %v524, %v532
        %v536 = vmul.f32 %v521, %v529
        %v537 = vmul.f32 %v522, %v533
        %vm538 = vcmask 588800
        %v540 = vsel %vm538, %v360, 0
        %542 = vmatprep.subr.mxu0 %v383
        %543 = vmatpush1.msra.mxu0 %v382
        %544 = vmatprep.subr.mxu0 %v405
        %545 = vmatpush1.msra.mxu0 %v404
        %546 = vmatprep.subr.mxu0 %v427
        %547 = vmatpush1.msra.mxu0 %v426
        %548 = vmatprep.subr.mxu0 %v449
        %549 = vmatpush1.msra.mxu0 %v448
        %550 = vmatprep.subr.mxu0 %v359
        %551 = vmatpush1.msra.mxu0 %v358
        %552 = vmatprep.subr.mxu0 %v471
        %553 = vmatpush1.msra.mxu0 %v470
        %554 = vmatprep.subr.mxu0 %v493
        %555 = vmatpush1.msra.mxu0 %v492
        %556 = vmatprep.subr.mxu0 %v515
        %557 = vmatpush1.msra.mxu0 %v514
        %558 = vmatprep.subr.mxu0 %v537
        %559 = vmatpush1.msra.mxu0 %v536
        %560 = vmatprep.subr.mxu0 0.0
        %561 = vmatpush1.msra.mxu0 0.0
        %562 = vmatprep.subr.mxu0 0.0
        %563 = vmatpush1.msra.mxu0 0.0
        %564 = vmatprep.subr.mxu0 0.0
        %565 = vmatpush1.msra.mxu0 0.0
        %566 = vmatprep.subr.mxu0 0.0
        %567 = vmatpush1.msra.mxu0 0.0
        %568 = vmatprep.subr.mxu0 0.0
        %569 = vmatpush1.msra.mxu0 0.0
        %570 = vmatprep.subr.mxu0 0.0
        %571 = vmatpush1.msra.mxu0 0.0
        %572 = vmatprep.subr.mxu0 0.0
        %573 = vmatpush1.msra.mxu0 0.0
        %574 = vmatprep.subr.mxu0 0.0
        %575 = vmatpush1.msra.mxu0 0.0
        %576 = vmatprep.subr.mxu0 0.0
        %577 = vmatpush1.msra.mxu0 0.0
        %578 = vmatprep.subr.mxu0 0.0
        %579 = vmatpush1.msra.mxu0 0.0
        %580 = vmatprep.subr.mxu0 0.0
        %581 = vmatpush1.msra.mxu0 0.0
        %582 = vmatprep.subr.mxu0 0.0
        %583 = vmatpush1.msra.mxu0 0.0
        %584 = vmatprep.subr.mxu0 0.0
        %585 = vmatpush1.msra.mxu0 0.0
        %586 = vmatprep.subr.mxu0 0.0
        %587 = vmatpush1.msra.mxu0 0.0
        %588 = vmatprep.subr.mxu0 0.0
        %589 = vmatpush1.msra.mxu0 0.0
        %590 = vmatprep.subr.mxu0 0.0
        %591 = vmatpush1.msra.mxu0 0.0
        %592 = vmatprep.subr.mxu0 0.0
        %593 = vmatpush1.msra.mxu0 0.0
        %594 = vmatprep.subr.mxu0 0.0
        %595 = vmatpush1.msra.mxu0 0.0
        %596 = vmatprep.subr.mxu0 0.0
        %597 = vmatpush1.msra.mxu0 0.0
        %598 = vmatprep.subr.mxu0 0.0
        %599 = vmatpush1.msra.mxu0 0.0
        %600 = vmatprep.subr.mxu0 0.0
        %601 = vmatpush1.msra.mxu0 0.0
        %602 = vmatprep.subr.mxu0 0.0
        %603 = vmatpush1.msra.mxu0 0.0
        %604 = vmatprep.subr.mxu0 0.0
        %605 = vmatpush1.msra.mxu0 0.0
        %606 = vmatprep.mubr.f32.mxu0 0.0
        %607 = vmatmul.mubr.f32.gmra.mrb[0].mxu0 %v540
        %v608 = vpop.f32.mrb[0].mxu0
        %v609 = vadd.f32 0.0, %v608
        %v610 = vpop.f32.mrb[0].mxu0
        %v611 = vadd.f32 0.0, %v610
        %612 = vdwg.mxu0
        %v613 = vld [vmem:[%s3] sm:$0xff]
        %615 = vset.pattern.permute.xlu0 0
        %616 = vperm.xlu0 %615, %v613
        %v617 = vpop.permute.xlu0 %616
        %v619 = vmul.f32 %v609, %v617
        %v620 = vmul.f32 %v611, %v617
        %v621 = vld [vmem:[%s4] sm:$0xff]
        %623 = vset.pattern.permute.xlu0 0
        %624 = vperm.xlu0 %623, %v621
        %v625 = vpop.permute.xlu0 %624
        %v627 = vadd.f32 %v619, %v625
        %v628 = vadd.f32 %v620, %v625
        %v629 = vmax.f32 %v627, 0.0
        %v630 = vmax.f32 %v628, 0.0
        %v631 = vld [vmem:[%s5] sm:$0xff]
        %632 = vrot.lane.b32.xlu0 %v629, 17
        %v633 = vpop.permute.xlu0 %632
        %634 = vrot.lane.b32.xlu0 %v630, 17
        %v635 = vpop.permute.xlu0 %634
        %v636 = vsel %vm367, %v633, %v635
        %v637 = vsel %vm367, %v635, %v633
        %v638 = vmul.f32 %v637, %v375
        %v639 = vmul.f32 %v636, %v379
        %640 = vrot.lane.b32.xlu0 %v629, 16
        %v641 = vpop.permute.xlu0 %640
        %642 = vrot.lane.b32.xlu0 %v630, 16
        %v643 = vpop.permute.xlu0 %642
        %v644 = vsel %vm388, %v641, %v643
        %v645 = vsel %vm388, %v643, %v641
        %v646 = vmul.f32 %v645, %v397
        %v647 = vmul.f32 %v644, %v401
        %648 = vrot.lane.b32.xlu0 %v629, 15
        %v649 = vpop.permute.xlu0 %648
        %650 = vrot.lane.b32.xlu0 %v630, 15
        %v651 = vpop.permute.xlu0 %650
        %v652 = vsel %vm410, %v649, %v651
        %v653 = vsel %vm410, %v651, %v649
        %v654 = vmul.f32 %v653, %v419
        %v655 = vmul.f32 %v652, %v423
        %656 = vrot.lane.b32.xlu0 %v629, 1
        %v657 = vpop.permute.xlu0 %656
        %658 = vrot.lane.b32.xlu0 %v630, 1
        %v659 = vpop.permute.xlu0 %658
        %v660 = vsel %vm432, %v657, %v659
        %v661 = vsel %vm432, %v659, %v657
        %v662 = vmul.f32 %v661, %v441
        %v663 = vmul.f32 %v660, %v445
        %664 = vrot.lane.b32.xlu0 %v629, 127
        %v665 = vpop.permute.xlu0 %664
        %666 = vrot.lane.b32.xlu0 %v630, 127
        %v667 = vpop.permute.xlu0 %666
        %v668 = vsel %vm454, %v665, %v667
        %v669 = vsel %vm454, %v667, %v665
        %v670 = vmul.f32 %v668, %v463
        %v671 = vmul.f32 %v669, %v467
        %672 = vrot.lane.b32.xlu0 %v629, 113
        %v673 = vpop.permute.xlu0 %672
        %674 = vrot.lane.b32.xlu0 %v630, 113
        %v675 = vpop.permute.xlu0 %674
        %v676 = vsel %vm476, %v673, %v675
        %v677 = vsel %vm476, %v675, %v673
        %v678 = vmul.f32 %v676, %v485
        %v679 = vmul.f32 %v677, %v489
        %680 = vrot.lane.b32.xlu0 %v629, 112
        %v681 = vpop.permute.xlu0 %680
        %682 = vrot.lane.b32.xlu0 %v630, 112
        %v683 = vpop.permute.xlu0 %682
        %v684 = vsel %vm498, %v681, %v683
        %v685 = vsel %vm498, %v683, %v681
        %v686 = vmul.f32 %v684, %v507
        %v687 = vmul.f32 %v685, %v511
        %688 = vrot.lane.b32.xlu0 %v629, 111
        %v689 = vpop.permute.xlu0 %688
        %690 = vrot.lane.b32.xlu0 %v630, 111
        %v691 = vpop.permute.xlu0 %690
        %v692 = vsel %vm520, %v689, %v691
        %v693 = vsel %vm520, %v691, %v689
        %v694 = vmul.f32 %v692, %v529
        %v695 = vmul.f32 %v693, %v533
        %v697 = vsel %vm538, %v631, 0
        %699 = vmatprep.subr.mxu0 %v639
        %700 = vmatpush1.msra.mxu0 %v638
        %701 = vmatprep.subr.mxu0 %v647
        %702 = vmatpush1.msra.mxu0 %v646
        %703 = vmatprep.subr.mxu0 %v655
        %704 = vmatpush1.msra.mxu0 %v654
        %705 = vmatprep.subr.mxu0 %v663
        %706 = vmatpush1.msra.mxu0 %v662
        %707 = vmatprep.subr.mxu0 %v630
        %708 = vmatpush1.msra.mxu0 %v629
        %709 = vmatprep.subr.mxu0 %v671
        %710 = vmatpush1.msra.mxu0 %v670
        %711 = vmatprep.subr.mxu0 %v679
        %712 = vmatpush1.msra.mxu0 %v678
        %713 = vmatprep.subr.mxu0 %v687
        %714 = vmatpush1.msra.mxu0 %v686
        %715 = vmatprep.subr.mxu0 %v695
        %716 = vmatpush1.msra.mxu0 %v694
        %717 = vmatprep.subr.mxu0 0.0
        %718 = vmatpush1.msra.mxu0 0.0
        %719 = vmatprep.subr.mxu0 0.0
        %720 = vmatpush1.msra.mxu0 0.0
        %721 = vmatprep.subr.mxu0 0.0
        %722 = vmatpush1.msra.mxu0 0.0
        %723 = vmatprep.subr.mxu0 0.0
        %724 = vmatpush1.msra.mxu0 0.0
        %725 = vmatprep.subr.mxu0 0.0
        %726 = vmatpush1.msra.mxu0 0.0
        %727 = vmatprep.subr.mxu0 0.0
        %728 = vmatpush1.msra.mxu0 0.0
        %729 = vmatprep.subr.mxu0 0.0
        %730 = vmatpush1.msra.mxu0 0.0
        %731 = vmatprep.subr.mxu0 0.0
        %732 = vmatpush1.msra.mxu0 0.0
        %733 = vmatprep.subr.mxu0 0.0
        %734 = vmatpush1.msra.mxu0 0.0
        %735 = vmatprep.subr.mxu0 0.0
        %736 = vmatpush1.msra.mxu0 0.0
        %737 = vmatprep.subr.mxu0 0.0
        %738 = vmatpush1.msra.mxu0 0.0
        %739 = vmatprep.subr.mxu0 0.0
        %740 = vmatpush1.msra.mxu0 0.0
        %741 = vmatprep.subr.mxu0 0.0
        %742 = vmatpush1.msra.mxu0 0.0
        %743 = vmatprep.subr.mxu0 0.0
        %744 = vmatpush1.msra.mxu0 0.0
        %745 = vmatprep.subr.mxu0 0.0
        %746 = vmatpush1.msra.mxu0 0.0
        %747 = vmatprep.subr.mxu0 0.0
        %748 = vmatpush1.msra.mxu0 0.0
        %749 = vmatprep.subr.mxu0 0.0
        %750 = vmatpush1.msra.mxu0 0.0
        %751 = vmatprep.subr.mxu0 0.0
        %752 = vmatpush1.msra.mxu0 0.0
        %753 = vmatprep.subr.mxu0 0.0
        %754 = vmatpush1.msra.mxu0 0.0
        %755 = vmatprep.subr.mxu0 0.0
        %756 = vmatpush1.msra.mxu0 0.0
        %757 = vmatprep.subr.mxu0 0.0
        %758 = vmatpush1.msra.mxu0 0.0
        %759 = vmatprep.subr.mxu0 0.0
        %760 = vmatpush1.msra.mxu0 0.0
        %761 = vmatprep.subr.mxu0 0.0
        %762 = vmatpush1.msra.mxu0 0.0
        %763 = vmatprep.mubr.f32.mxu0 0.0
        %764 = vmatmul.mubr.f32.gmra.mrb[0].mxu0 %v697
        %v765 = vpop.f32.mrb[0].mxu0
        %v766 = vadd.f32 0.0, %v765
        %v767 = vpop.f32.mrb[0].mxu0
        %v768 = vadd.f32 0.0, %v767
        %769 = vdwg.mxu0
        %v770 = vld [vmem:[%s6] sm:$0xff]
        %772 = vset.pattern.permute.xlu0 0
        %773 = vperm.xlu0 %772, %v770
        %v774 = vpop.permute.xlu0 %773
        %v776 = vmul.f32 %v766, %v774
        %v777 = vmul.f32 %v768, %v774
        %v778 = vld [vmem:[%s7] sm:$0xff]
        %780 = vset.pattern.permute.xlu0 0
        %781 = vperm.xlu0 %780, %v778
        %v782 = vpop.permute.xlu0 %781
        %v784 = vadd.f32 %v776, %v782
        %v785 = vadd.f32 %v777, %v782
        %v786 = vmax.f32 %v784, 0.0
        %v787 = vmax.f32 %v785, 0.0
        %v788 = vld [vmem:[%s8] sm:$0xff]
        %v789 = vld [vmem:[%s8 + $0x8] sm:$0xff]
        %v790 = vld [vmem:[%s9] sm:$0xff]
        %v791 = vld [vmem:[%s9 + $0x8] sm:$0xff]
        %793 = vset.pattern.permute.xlu0 0
        %794 = vperm.xlu0 %793, %v790
        %v795 = vpop.permute.xlu0 %794
        %798 = vset.pattern.permute.xlu0 0
        %799 = vperm.xlu0 %798, %v791
        %v800 = vpop.permute.xlu0 %799
        %vm802 = vcmask 64512
        %v804 = vsel %vm802, %v788, 0
        %v807 = vsel %vm802, %v789, 0
        %809 = vmatprep.subr.mxu0 %v787
        %810 = vmatpush1.msra.mxu0 %v786
        %811 = vmatprep.subr.mxu0 0.0
        %812 = vmatpush1.msra.mxu0 0.0
        %813 = vmatprep.subr.mxu0 0.0
        %814 = vmatpush1.msra.mxu0 0.0
        %815 = vmatprep.subr.mxu0 0.0
        %816 = vmatpush1.msra.mxu0 0.0
        %817 = vmatprep.subr.mxu0 0.0
        %818 = vmatpush1.msra.mxu0 0.0
        %819 = vmatprep.subr.mxu0 0.0
        %820 = vmatpush1.msra.mxu0 0.0
        %821 = vmatprep.subr.mxu0 0.0
        %822 = vmatpush1.msra.mxu0 0.0
        %823 = vmatprep.subr.mxu0 0.0
        %824 = vmatpush1.msra.mxu0 0.0
        %825 = vmatprep.subr.mxu0 0.0
        %826 = vmatpush1.msra.mxu0 0.0
        %827 = vmatprep.subr.mxu0 0.0
        %828 = vmatpush1.msra.mxu0 0.0
        %829 = vmatprep.subr.mxu0 0.0
        %830 = vmatpush1.msra.mxu0 0.0
        %831 = vmatprep.subr.mxu0 0.0
        %832 = vmatpush1.msra.mxu0 0.0
        %833 = vmatprep.subr.mxu0 0.0
        %834 = vmatpush1.msra.mxu0 0.0
        %835 = vmatprep.subr.mxu0 0.0
        %836 = vmatpush1.msra.mxu0 0.0
        %837 = vmatprep.subr.mxu0 0.0
        %838 = vmatpush1.msra.mxu0 0.0
        %839 = vmatprep.subr.mxu0 0.0
        %840 = vmatpush1.msra.mxu0 0.0
        %841 = vmatprep.subr.mxu0 0.0
        %842 = vmatpush1.msra.mxu0 0.0
        %843 = vmatprep.subr.mxu0 0.0
        %844 = vmatpush1.msra.mxu0 0.0
        %845 = vmatprep.subr.mxu0 0.0
        %846 = vmatpush1.msra.mxu0 0.0
        %847 = vmatprep.subr.mxu0 0.0
        %848 = vmatpush1.msra.mxu0 0.0
        %849 = vmatprep.subr.mxu0 0.0
        %850 = vmatpush1.msra.mxu0 0.0
        %851 = vmatprep.subr.mxu0 0.0
        %852 = vmatpush1.msra.mxu0 0.0
        %853 = vmatprep.subr.mxu0 0.0
        %854 = vmatpush1.msra.mxu0 0.0
        %855 = vmatprep.subr.mxu0 0.0
        %856 = vmatpush1.msra.mxu0 0.0
        %857 = vmatprep.subr.mxu0 0.0
        %858 = vmatpush1.msra.mxu0 0.0
        %859 = vmatprep.subr.mxu0 0.0
        %860 = vmatpush1.msra.mxu0 0.0
        %861 = vmatprep.subr.mxu0 0.0
        %862 = vmatpush1.msra.mxu0 0.0
        %863 = vmatprep.subr.mxu0 0.0
        %864 = vmatpush1.msra.mxu0 0.0
        %865 = vmatprep.subr.mxu0 0.0
        %866 = vmatpush1.msra.mxu0 0.0
        %867 = vmatprep.subr.mxu0 0.0
        %868 = vmatpush1.msra.mxu0 0.0
        %869 = vmatprep.subr.mxu0 0.0
        %870 = vmatpush1.msra.mxu0 0.0
        %871 = vmatprep.subr.mxu0 0.0
        %872 = vmatpush1.msra.mxu0 0.0
        %873 = vmatprep.mubr.f32.mxu0 0.0
        %874 = vmatmul.mubr.f32.gmra.mrb[0].mxu0 %v804
        %v875 = vpop.f32.mrb[0].mxu0
        %v876 = vadd.f32 %v795, %v875
        %v877 = vpop.f32.mrb[0].mxu0
        %v878 = vadd.f32 %v795, %v877
        %879 = vmatprep.mubr.f32.mxu0 0.0
        %880 = vmatmul.mubr.f32.gmra.mrb[0].mxu0 %v807
        %v881 = vpop.f32.mrb[0].mxu0
        %v882 = vadd.f32 %v800, %v881
        %v883 = vpop.f32.mrb[0].mxu0
        %v884 = vadd.f32 %v800, %v883
        %885 = vdwg.mxu0
        %886 = vst [vmem:[%s352] sm:$0xff] %v876
        %887 = vst [vmem:[%s352 + $0x8] sm:$0xff] %v878
        %888 = vst [vmem:[%s352 + $0x10] sm:$0xff] %v882
        %889 = vst [vmem:[%s352 + $0x18] sm:$0xff] %v884
        %s890 = sand.u32 %s247, 1
        %s891 = scalar_lea.sflag [#allocation3], %s890
        %s892 = sand.u32 %s247, 1
        %s893 = smul.addr %s892, 32
        %s894 = scalar_lea.vmem [#allocation2], %s893
        // Predicated region
        $region61: #{tpu_custom_call.1} parent=59 // pred_check
          %p895 = pneg %p257
        $region62: #{tpu_custom_call.1} parent=59 // pred_check_branch
          %897 = sbr.rel (%p895) target = $region64
        $region63: #{tpu_custom_call.1} parent=59 // pred_region
          %s899 = ssub.s32 512, 512
          %900 = vsyncadd %s891, %s899
          %s901 = smul.addr %s24, 4
          %s902 = smul.addr %s901, 128
          %s903 = scalar_lea.hbm %s10, %s902
          %s904 = sshll.u32 %s894, 4
          %s905 = int_to_ptr.vmem [resolvable:$true] %s904
          %910 = dma.vmem_to_hbm [thread:$0]  %s905, 512, %s903, %s891, 256, 256, 16
        $region64: #{tpu_custom_call.1} parent=59 // pred_fallthru
          _
      $region60: #{tpu_custom_call.1} parent=5 // pred_fallthru
        _
      %p911 = scmp.le.s32.totalorder 2, %s19
      // Predicated region
      $region65: #{tpu_custom_call.1} parent=5 // pred_check
        %p912 = pneg %p911
      $region66: #{tpu_custom_call.1} parent=5 // pred_check_branch
        %914 = sbr.rel (%p912) target = $region68
      $region67: #{tpu_custom_call.1} parent=5 // pred_region
        %s915 = ssub.s32 %s19, 2
        // Predicated region
        $region69: #{tpu_custom_call.1} parent=67 // pred_check
          %p916 = pneg %p263
        $region70: #{tpu_custom_call.1} parent=67 // pred_check_branch
          %918 = sbr.rel (%p916) target = $region72
        $region71: #{tpu_custom_call.1} parent=67 // pred_region
          %s919 = sand.u32 %s248, 1
          %s920 = scalar_lea.sflag [#allocation3], %s919
          %s921 = sand.u32 %s248, 1
          %s922 = smul.addr %s921, 32
          %s923 = scalar_lea.vmem [#allocation2], %s922
          %924 = dma.done %s920, 512
        $region72: #{tpu_custom_call.1} parent=67 // pred_fallthru
          _
      $region68: #{tpu_custom_call.1} parent=5 // pred_fallthru
        _
    $region6: #{tpu_custom_call.1} parent=1 // loop_footer
      %s23 = sadd.s32 1, %s19
    $region7: #{tpu_custom_call.1} parent=1 // loop_footer_branch
      %18 = sbr.rel target = $region3
    $region8: #{tpu_custom_call.1} parent=1 // loop_exit
      _
    %925 = vsyncpa [#allocation3], 1
    %s926 = scalar_lea.sflag [#allocation3], 1
    %927 = vsyncpa %s926, 1

</llo_original>
